<compile_context>
chip_gen: v7x
topology: tpu7x:2x2x1
jax: 0.10.0
libtpu: 0.0.40
codegen_flags: <defaults>
</compile_context>

<pallas_src>
import jax
import jax.numpy as jnp
from jax.experimental import pallas as pl
from jax.experimental.pallas import tpu as pltpu  # noqa: F401  (TPU backend)


# ---------------------------------------------------------------------------
# Hyper-parameters (mirrors EPD_predictor.__init__ arguments)
# ---------------------------------------------------------------------------
NUM_STEPS = 8          # -> parameter tables have NUM_STEPS - 1 = 7 rows
NUM_POINTS = 2
SCALE_DIR = 0.01       # > 0 so the scale_dir branch is active
SCALE_TIME = 0.1       # > 0 so the scale_time branch is active


def _sigmoid(x):
    # Exact sigmoid: one EUP exp + one exact divide.  Deliberately NOT the
    # approximate reciprocal -- the kernel is launch-overhead bound and the
    # approx path may not meet the 1e-5 validation tolerance.
    return 1.0 / (1.0 + jnp.exp(-x))


def _epd_table_kernel(r_ref, sd_ref, st_ref, r_out, sd_out, st_out):
    """Transform the whole (S-1, P) parameter tables in one shot.

      r_out  = sigmoid(r)
      sd_out = 2 * sigmoid(0.5 * sd) * SCALE_DIR  + (1 - SCALE_DIR)
      st_out = 2 * sigmoid(0.5 * st) * SCALE_TIME + (1 - SCALE_TIME)

    All tables fit in a fraction of one vreg; this is pure VPU/EUP work.
    """
    r_out[...] = _sigmoid(r_ref[...])
    sd_out[...] = 2.0 * _sigmoid(0.5 * sd_ref[...]) * SCALE_DIR + (1.0 - SCALE_DIR)
    st_out[...] = 2.0 * _sigmoid(0.5 * st_ref[...]) * SCALE_TIME + (1.0 - SCALE_TIME)


@jax.jit
def transform_epd_tables(r_params, scale_dir_params, scale_time_params):
    """ONE Pallas launch that transforms every row of all three tables.

    Call once at init / whenever the parameters change.  The per-step forward
    then only does a fused XLA row pick + batch broadcast (no kernel launch).
    """
    s1, p = r_params.shape
    tab = jax.ShapeDtypeStruct((s1, p), jnp.float32)
    spec = pl.BlockSpec((s1, p), lambda i: (0, 0))   # full-array block (allowed)
    return pl.pallas_call(
        _epd_table_kernel,
        out_shape=(tab, tab, tab),
        grid=(1,),
        in_specs=[spec, spec, spec],
        out_specs=(spec, spec, spec),
    )(r_params.astype(jnp.float32),
      scale_dir_params.astype(jnp.float32),
      scale_time_params.astype(jnp.float32))


@jax.jit
def epd_predictor_forward(r_table, scale_dir_table, scale_time_table,
                          unet_bottleneck, step_idx):
    """Per-diffusion-step forward (matches EPD_predictor.forward semantics).

    Row pick + batch broadcast only; fuses under jit into the consumer.
    `step_idx` must be a device int32 scalar.  `unet_bottleneck` only supplies
    the batch size, exactly as in the PyTorch reference.
    """
    batch = unet_bottleneck.shape[0]
    p = r_table.shape[1]
    r = jnp.broadcast_to(r_table[step_idx][None, :], (batch, p))
    sd = jnp.broadcast_to(scale_dir_table[step_idx][None, :], (batch, p))
    st = jnp.broadcast_to(scale_time_table[step_idx][None, :], (batch, p))
    return r, sd, st


def _reference_forward(unet_bottleneck, step_idx,
                       r_params, scale_dir_params, scale_time_params):
    """Pure-JAX reference mirroring the PyTorch forward."""
    batch = unet_bottleneck.shape[0]
    r = jnp.tile(r_params[step_idx][None, :], (batch, 1))
    r = jax.nn.sigmoid(r)
    sd = jnp.tile(scale_dir_params[step_idx][None, :], (batch, 1))
    sd = 2.0 * jax.nn.sigmoid(0.5 * sd) * SCALE_DIR + (1.0 - SCALE_DIR)
    st = jnp.tile(scale_time_params[step_idx][None, :], (batch, 1))
    st = 2.0 * jax.nn.sigmoid(0.5 * st) * SCALE_TIME + (1.0 - SCALE_TIME)
    return r, sd, st


if __name__ == "__main__":
    key = jax.random.PRNGKey(0)
    k0, k1, k2, k3 = jax.random.split(key, 4)

    # Deterministic "randn" parameters (same shapes as nn.Parameter in __init__).
    r_params = jax.random.normal(k0, (NUM_STEPS - 1, NUM_POINTS), jnp.float32)
    scale_dir_params = jax.random.normal(k1, (NUM_STEPS - 1, NUM_POINTS), jnp.float32)
    scale_time_params = jax.random.normal(k2, (NUM_STEPS - 1, NUM_POINTS), jnp.float32)

    # unet_bottleneck in NCHW; only its batch size matters for the forward.
    unet_bottleneck = jax.random.normal(k3, (2, 4, 16, 16), jnp.float32)

    # One Pallas launch transforms all rows of all three tables (hoisted out
    # of the per-step path).
    tables = jax.block_until_ready(
        transform_epd_tables(r_params, scale_dir_params, scale_time_params))

    # Per-step forward is launch-free: jitted row pick + batch broadcast.
    for step in (0, 3, NUM_STEPS - 2):
        step_idx = jnp.int32(step)        # device scalar, not a Python int
        outs = jax.block_until_ready(
            epd_predictor_forward(*tables, unet_bottleneck, step_idx))
        refs = _reference_forward(unet_bottleneck, step,
                                  r_params, scale_dir_params, scale_time_params)
        for o, ref in zip(outs, refs):
            assert o.shape == ref.shape and o.dtype == ref.dtype
            assert jnp.allclose(o, ref, atol=1e-5, rtol=1e-5)

    print("KERNEL_OK")
</pallas_src>

<mosaic_0001>
module attributes {stable_mosaic.version = 11 : i64} {
  func.func @_epd_table_kernel(%arg0: i32, %arg1: memref<7x2xf32, #tpu.memory_space<vmem>>, %arg2: memref<7x2xf32, #tpu.memory_space<vmem>>, %arg3: memref<7x2xf32, #tpu.memory_space<vmem>>, %arg4: memref<7x2xf32, #tpu.memory_space<vmem>>, %arg5: memref<7x2xf32, #tpu.memory_space<vmem>>, %arg6: memref<7x2xf32, #tpu.memory_space<vmem>>) attributes {dimension_semantics = [#tpu.dimension_semantics<arbitrary>], iteration_bounds = array<i64: 1>, scalar_prefetch = 0 : i64, scratch_operands = 0 : i64, tpu.core_type = #tpu.core_type<tc>, window_params = [{pipeline_mode = #tpu.pipeline_mode<synchronous>, transform_indices = @transform_0, window_bounds = array<i64: 7, 2>}, {pipeline_mode = #tpu.pipeline_mode<synchronous>, transform_indices = @transform_1, window_bounds = array<i64: 7, 2>}, {pipeline_mode = #tpu.pipeline_mode<synchronous>, transform_indices = @transform_2, window_bounds = array<i64: 7, 2>}, {pipeline_mode = #tpu.pipeline_mode<synchronous>, transform_indices = @transform_3, window_bounds = array<i64: 7, 2>}, {pipeline_mode = #tpu.pipeline_mode<synchronous>, transform_indices = @transform_4, window_bounds = array<i64: 7, 2>}, {pipeline_mode = #tpu.pipeline_mode<synchronous>, transform_indices = @transform_5, window_bounds = array<i64: 7, 2>}]} {
    %c0 = arith.constant 0 : index
    %c0_0 = arith.constant 0 : index
    %0 = vector.load %arg1[%c0, %c0_0] : memref<7x2xf32, #tpu.memory_space<vmem>>, vector<7x2xf32>
    %cst = arith.constant 0.000000e+00 : f32
    %1 = vector.broadcast %cst : f32 to vector<7x2xf32>
    %2 = arith.subf %1, %0 : vector<7x2xf32>
    %3 = math.exp %2 : vector<7x2xf32>
    %cst_1 = arith.constant 1.000000e+00 : f32
    %4 = vector.broadcast %cst_1 : f32 to vector<7x2xf32>
    %5 = arith.addf %4, %3 : vector<7x2xf32>
    %cst_2 = arith.constant 1.000000e+00 : f32
    %6 = vector.broadcast %cst_2 : f32 to vector<7x2xf32>
    %7 = arith.divf %6, %5 : vector<7x2xf32>
    %c0_3 = arith.constant 0 : index
    %c0_4 = arith.constant 0 : index
    %8 = vector.load %arg4[%c0_3, %c0_4] : memref<7x2xf32, #tpu.memory_space<vmem>>, vector<7x2xf32>
    tpu.vector_store %arg4[%c0_3, %c0_4], %7 {strides = array<i32>} : memref<7x2xf32, #tpu.memory_space<vmem>>, vector<7x2xf32>,
    %c0_5 = arith.constant 0 : index
    %c0_6 = arith.constant 0 : index
    %9 = vector.load %arg2[%c0_5, %c0_6] : memref<7x2xf32, #tpu.memory_space<vmem>>, vector<7x2xf32>
    %cst_7 = arith.constant 5.000000e-01 : f32
    %10 = vector.broadcast %cst_7 : f32 to vector<7x2xf32>
    %11 = arith.mulf %10, %9 : vector<7x2xf32>
    %cst_8 = arith.constant 0.000000e+00 : f32
    %12 = vector.broadcast %cst_8 : f32 to vector<7x2xf32>
    %13 = arith.subf %12, %11 : vector<7x2xf32>
    %14 = math.exp %13 : vector<7x2xf32>
    %cst_9 = arith.constant 1.000000e+00 : f32
    %15 = vector.broadcast %cst_9 : f32 to vector<7x2xf32>
    %16 = arith.addf %15, %14 : vector<7x2xf32>
    %cst_10 = arith.constant 1.000000e+00 : f32
    %17 = vector.broadcast %cst_10 : f32 to vector<7x2xf32>
    %18 = arith.divf %17, %16 : vector<7x2xf32>
    %cst_11 = arith.constant 2.000000e+00 : f32
    %19 = vector.broadcast %cst_11 : f32 to vector<7x2xf32>
    %20 = arith.mulf %19, %18 : vector<7x2xf32>
    %cst_12 = arith.constant 0.00999999977 : f32
    %21 = vector.broadcast %cst_12 : f32 to vector<7x2xf32>
    %22 = arith.mulf %20, %21 : vector<7x2xf32>
    %cst_13 = arith.constant 9.900000e-01 : f32
    %23 = vector.broadcast %cst_13 : f32 to vector<7x2xf32>
    %24 = arith.addf %22, %23 : vector<7x2xf32>
    %c0_14 = arith.constant 0 : index
    %c0_15 = arith.constant 0 : index
    %25 = vector.load %arg5[%c0_14, %c0_15] : memref<7x2xf32, #tpu.memory_space<vmem>>, vector<7x2xf32>
    tpu.vector_store %arg5[%c0_14, %c0_15], %24 {strides = array<i32>} : memref<7x2xf32, #tpu.memory_space<vmem>>, vector<7x2xf32>,
    %c0_16 = arith.constant 0 : index
    %c0_17 = arith.constant 0 : index
    %26 = vector.load %arg3[%c0_16, %c0_17] : memref<7x2xf32, #tpu.memory_space<vmem>>, vector<7x2xf32>
    %cst_18 = arith.constant 5.000000e-01 : f32
    %27 = vector.broadcast %cst_18 : f32 to vector<7x2xf32>
    %28 = arith.mulf %27, %26 : vector<7x2xf32>
    %cst_19 = arith.constant 0.000000e+00 : f32
    %29 = vector.broadcast %cst_19 : f32 to vector<7x2xf32>
    %30 = arith.subf %29, %28 : vector<7x2xf32>
    %31 = math.exp %30 : vector<7x2xf32>
    %cst_20 = arith.constant 1.000000e+00 : f32
    %32 = vector.broadcast %cst_20 : f32 to vector<7x2xf32>
    %33 = arith.addf %32, %31 : vector<7x2xf32>
    %cst_21 = arith.constant 1.000000e+00 : f32
    %34 = vector.broadcast %cst_21 : f32 to vector<7x2xf32>
    %35 = arith.divf %34, %33 : vector<7x2xf32>
    %cst_22 = arith.constant 2.000000e+00 : f32
    %36 = vector.broadcast %cst_22 : f32 to vector<7x2xf32>
    %37 = arith.mulf %36, %35 : vector<7x2xf32>
    %cst_23 = arith.constant 1.000000e-01 : f32
    %38 = vector.broadcast %cst_23 : f32 to vector<7x2xf32>
    %39 = arith.mulf %37, %38 : vector<7x2xf32>
    %cst_24 = arith.constant 0.899999976 : f32
    %40 = vector.broadcast %cst_24 : f32 to vector<7x2xf32>
    %41 = arith.addf %39, %40 : vector<7x2xf32>
    %c0_25 = arith.constant 0 : index
    %c0_26 = arith.constant 0 : index
    %42 = vector.load %arg6[%c0_25, %c0_26] : memref<7x2xf32, #tpu.memory_space<vmem>>, vector<7x2xf32>
    tpu.vector_store %arg6[%c0_25, %c0_26], %41 {strides = array<i32>} : memref<7x2xf32, #tpu.memory_space<vmem>>, vector<7x2xf32>,
    return
  }
  func.func @transform_0(%arg0: i32) -> (i32, i32) {
    %c0_i32 = arith.constant 0 : i32
    %c0_i32_0 = arith.constant 0 : i32
    %c0_i32_1 = arith.constant 0 : i32
    return %c0_i32, %c0_i32_0 : i32, i32
  }
  func.func @transform_1(%arg0: i32) -> (i32, i32) {
    %c0_i32 = arith.constant 0 : i32
    %c0_i32_0 = arith.constant 0 : i32
    %c0_i32_1 = arith.constant 0 : i32
    return %c0_i32, %c0_i32_0 : i32, i32
  }
  func.func @transform_2(%arg0: i32) -> (i32, i32) {
    %c0_i32 = arith.constant 0 : i32
    %c0_i32_0 = arith.constant 0 : i32
    %c0_i32_1 = arith.constant 0 : i32
    return %c0_i32, %c0_i32_0 : i32, i32
  }
  func.func @transform_3(%arg0: i32) -> (i32, i32) {
    %c0_i32 = arith.constant 0 : i32
    %c0_i32_0 = arith.constant 0 : i32
    %c0_i32_1 = arith.constant 0 : i32
    return %c0_i32, %c0_i32_0 : i32, i32
  }
  func.func @transform_4(%arg0: i32) -> (i32, i32) {
    %c0_i32 = arith.constant 0 : i32
    %c0_i32_0 = arith.constant 0 : i32
    %c0_i32_1 = arith.constant 0 : i32
    return %c0_i32, %c0_i32_0 : i32, i32
  }
  func.func @transform_5(%arg0: i32) -> (i32, i32) {
    %c0_i32 = arith.constant 0 : i32
    %c0_i32_0 = arith.constant 0 : i32
    %c0_i32_1 = arith.constant 0 : i32
    return %c0_i32, %c0_i32_0 : i32, i32
  }
}

</mosaic_0001>

<llo_original>
// kernel: transform_epd_tables.1
$region0: #{transform_epd_tables.1}
  #allocation0 [shape = 'u32[]', space=smem, size = 0x4, offset = 0x4, fixed_abs, tag = 'smem constant byte address 0x4 - core index']
  #allocation1 [shape = 'u32[144,128]{1,0:T(1,128)}', space=vmem, size = 0x12000, scoped, tag = 'internal scratch']
  %s0 = inlined_call_operand.vmem [shape: f32[7,2], index: 0, kind: input, shape index: {}]
  %s1 = inlined_call_operand.vmem [shape: f32[7,2], index: 1, kind: input, shape index: {}]
  %s2 = inlined_call_operand.vmem [shape: f32[7,2], index: 2, kind: input, shape index: {}]
  %s3 = inlined_call_operand.vmem [shape: f32[7,2], index: 3, kind: output, shape index: {0}]
  %s4 = inlined_call_operand.vmem [shape: f32[7,2], index: 4, kind: output, shape index: {1}]
  %s5 = inlined_call_operand.vmem [shape: f32[7,2], index: 5, kind: output, shape index: {2}]
  %6 = xla_tuple %s3, %s4, %s5
  %s7 = sld [smem:[#allocation0]]
  $region38: #{transform_epd_tables.1} parent=0
    _
  %s9 = ssub.s32 1, %s7
  %s10 = scalar_select 0, %s9, %s7
  // Predicated region
  $region2: #{transform_epd_tables.1} parent=0 // pred_check
    _
  $region3: #{transform_epd_tables.1} parent=0 // pred_check_branch
    %12 = sbr.rel (0) target = $region5
  $region4: #{transform_epd_tables.1} parent=0 // pred_region
    _
  $region5: #{transform_epd_tables.1} parent=0 // pred_fallthru
    _
  // Predicated region
  $region6: #{transform_epd_tables.1} parent=0 // pred_check
    _
  $region7: #{transform_epd_tables.1} parent=0 // pred_check_branch
    %14 = sbr.rel (0) target = $region9
  $region8: #{transform_epd_tables.1} parent=0 // pred_region
    _
  $region9: #{transform_epd_tables.1} parent=0 // pred_fallthru
    _
  // Predicated region
  $region10: #{transform_epd_tables.1} parent=0 // pred_check
    _
  $region11: #{transform_epd_tables.1} parent=0 // pred_check_branch
    %16 = sbr.rel (0) target = $region13
  $region12: #{transform_epd_tables.1} parent=0 // pred_region
    _
  $region13: #{transform_epd_tables.1} parent=0 // pred_fallthru
    _
  %v17 = vld [vmem:[%s0] sm:$0x7f]
  %v18 = vsub.f32 0.0, %v17
  %v19 = vmul.f32 %v18, 1.442695
  %v20 = vpow.pop %v19
  %v21 = vadd.f32 %v20, 1.0
  %v22 = vrcp.pop %v21
  %v23 = vmul.f32 1.0, %v22
  %vm24 = vcmask 14336
  %25 = vst.msk [vmem:[%s3] sm:$0x7f] %vm24, %v23
  %v26 = vld [vmem:[%s1] sm:$0x7f]
  %v27 = vmul.f32 %v26, 0.5
  %v28 = vsub.f32 0.0, %v27
  %v29 = vmul.f32 %v28, 1.442695
  %v30 = vpow.pop %v29
  %v31 = vadd.f32 %v30, 1.0
  %v32 = vrcp.pop %v31
  %v33 = vmul.f32 1.0, %v32
  %v34 = vmul.f32 %v33, 2.0
  %v35 = vmul.f32 %v34, 0.01
  %v36 = vadd.f32 %v35, 0.99
  %37 = vst.msk [vmem:[%s4] sm:$0x7f] %vm24, %v36
  %v38 = vld [vmem:[%s2] sm:$0x7f]
  %v39 = vmul.f32 %v38, 0.5
  %v40 = vsub.f32 0.0, %v39
  %v41 = vmul.f32 %v40, 1.442695
  %v42 = vpow.pop %v41
  %v43 = vadd.f32 %v42, 1.0
  %v44 = vrcp.pop %v43
  %v45 = vmul.f32 1.0, %v44
  %v46 = vmul.f32 %v45, 2.0
  %v47 = vmul.f32 %v46, 0.1
  %v48 = vadd.f32 %v47, 0.9
  %49 = vst.msk [vmem:[%s5] sm:$0x7f] %vm24, %v48
  // Predicated region
  $region14: #{transform_epd_tables.1} parent=0 // pred_check
    _
  $region15: #{transform_epd_tables.1} parent=0 // pred_check_branch
    %51 = sbr.rel (0) target = $region17
  $region16: #{transform_epd_tables.1} parent=0 // pred_region
    _
  $region17: #{transform_epd_tables.1} parent=0 // pred_fallthru
    _
  // Predicated region
  $region18: #{transform_epd_tables.1} parent=0 // pred_check
    _
  $region19: #{transform_epd_tables.1} parent=0 // pred_check_branch
    %53 = sbr.rel (0) target = $region21
  $region20: #{transform_epd_tables.1} parent=0 // pred_region
    _
  $region21: #{transform_epd_tables.1} parent=0 // pred_fallthru
    _
  // Predicated region
  $region22: #{transform_epd_tables.1} parent=0 // pred_check
    _
  $region23: #{transform_epd_tables.1} parent=0 // pred_check_branch
    %55 = sbr.rel (0) target = $region25
  $region24: #{transform_epd_tables.1} parent=0 // pred_region
    _
  $region25: #{transform_epd_tables.1} parent=0 // pred_fallthru
    _
  // Predicated region
  $region26: #{transform_epd_tables.1} parent=0 // pred_check
    _
  $region27: #{transform_epd_tables.1} parent=0 // pred_check_branch
    %57 = sbr.rel (0) target = $region29
  $region28: #{transform_epd_tables.1} parent=0 // pred_region
    _
  $region29: #{transform_epd_tables.1} parent=0 // pred_fallthru
    _
  // Predicated region
  $region30: #{transform_epd_tables.1} parent=0 // pred_check
    _
  $region31: #{transform_epd_tables.1} parent=0 // pred_check_branch
    %59 = sbr.rel (0) target = $region33
  $region32: #{transform_epd_tables.1} parent=0 // pred_region
    _
  $region33: #{transform_epd_tables.1} parent=0 // pred_fallthru
    _
  // Predicated region
  $region34: #{transform_epd_tables.1} parent=0 // pred_check
    _
  $region35: #{transform_epd_tables.1} parent=0 // pred_check_branch
    %61 = sbr.rel (0) target = $region37
  $region36: #{transform_epd_tables.1} parent=0 // pred_region
    _
  $region37: #{transform_epd_tables.1} parent=0 // pred_fallthru
    _

</llo_original>
